<compile_context>
chip_gen: v6e
topology: v6e:2x2x1
jax: 0.10.0
libtpu: 0.0.40
codegen_flags: <defaults>
</compile_context>

<pallas_src>
import functools

import jax
import jax.numpy as jnp
from jax import lax
from jax.experimental import pallas as pl
from jax.experimental.pallas import tpu as pltpu


def _round_up(x, m):
    return (x + m - 1) // m * m


# ----------------------------------------------------------------------------
# Glue: exact PyTorch F.interpolate(mode='bilinear', align_corners=False)
# ----------------------------------------------------------------------------
def bilinear_upsample_nhwc(x, out_h, out_w):
    n, in_h, in_w, c = x.shape

    def coeffs(out_size, in_size):
        scale = in_size / out_size
        d = (jnp.arange(out_size, dtype=jnp.float32) + 0.5) * scale - 0.5
        d = jnp.maximum(d, 0.0)                       # PyTorch clamps negatives
        i0 = jnp.floor(d).astype(jnp.int32)
        i0 = jnp.minimum(i0, in_size - 1)
        i1 = jnp.minimum(i0 + 1, in_size - 1)
        w = d - i0.astype(jnp.float32)
        return i0, i1, w

    h0, h1, wh = coeffs(out_h, in_h)
    w0, w1, ww = coeffs(out_w, in_w)
    rows = (x[:, h0, :, :] * (1.0 - wh)[None, :, None, None]
            + x[:, h1, :, :] * wh[None, :, None, None])
    out = (rows[:, :, w0, :] * (1.0 - ww)[None, None, :, None]
           + rows[:, :, w1, :] * ww[None, None, :, None])
    return out


# ----------------------------------------------------------------------------
# One-time probe of pltpu.roll's rotation direction on the sublane axis.
# Cached per device kind so a mixed-backend process can't reuse a stale answer.
# ----------------------------------------------------------------------------
@functools.lru_cache(maxsize=None)
def _roll_is_jnp_like_for(_device_kind):
    def probe(x_ref, o_ref):
        o_ref[...] = pltpu.roll(x_ref[...], 1, 0)

    x = jnp.zeros((8, 128), jnp.float32).at[0, 0].set(1.0)
    y = pl.pallas_call(
        probe, out_shape=jax.ShapeDtypeStruct((8, 128), jnp.float32))(x)
    return bool(y[1, 0] == 1.0)


def _pltpu_roll_is_jnp_like():
    return _roll_is_jnp_like_for(jax.devices()[0].device_kind)


def _shift_rows_down(m, s, roll_like_jnp):
    """result[j] = m[j - s] for j >= s (rows move toward higher indices)."""
    if s == 0:
        return m
    shift = s if roll_like_jnp else m.shape[0] - s
    return pltpu.roll(m, shift, 0)


# ----------------------------------------------------------------------------
# Pallas kernel: fused decoder for one batch element
# ----------------------------------------------------------------------------
def _decoder_kernel(xup_ref, low_ref,
                    wll_ref, sll_ref, bll_ref,
                    w1_ref, s1_ref, b1_ref,
                    w2_ref, s2_ref, b2_ref,
                    w3_ref, b3_ref,
                    out_ref,
                    pad_a, pad_b,
                    *, H, W, Wp, roll_like_jnp):
    f32 = jnp.float32
    HWp = H * Wp
    c_low = low_ref.shape[-1]

    # Per-step border init (top/bottom "same" padding rows).  The interior
    # rows are fully rewritten below, so this is all that must be zero every
    # step — which keeps the batch grid axis safe under "parallel" semantics
    # (v7x second TensorCore gets its own scratch and its own init).
    pad_a[0] = jnp.zeros((Wp, 128), pad_a.dtype)
    pad_a[H + 1] = jnp.zeros((Wp, 128), pad_a.dtype)
    pad_b[0] = jnp.zeros((Wp, 64), pad_b.dtype)
    pad_b[H + 1] = jnp.zeros((Wp, 64), pad_b.dtype)

    # --- low-level path: 1x1 conv (no bias, 48 -> padded 64 out) + BN + ReLU
    low = low_ref[0].reshape(H * W, c_low)
    low1 = jnp.dot(low, wll_ref[...], preferred_element_type=f32)
    low1 = jnp.maximum(low1 * sll_ref[...] + bll_ref[...], 0.0)

    # --- stage-1 padded input: ONE aligned, lane-dense 128-wide store --------
    # Lanes [0,64) = x_up, [64,112) = low1, [112,128) = zeros (zero-padded
    # weights/scale/bias make them exactly 0).  Data column origin is 0; the
    # "same" left padding at x == 0 is borrowed from the always-zero right
    # columns [W, Wp) via the roll wrap-around (requires Wp >= W + 2).
    cat = jnp.concatenate(
        [xup_ref[0], low1.reshape(H, W, 64).astype(pad_a.dtype)], axis=-1)
    cat = jnp.concatenate(
        [cat, jnp.zeros((H, Wp - W, 128), pad_a.dtype)], axis=1)
    pad_a[1:H + 1, :, :] = cat

    def conv3x3(pad_ref, wf_ref):
        """3x3 'same' conv over a zero-padded scratch (data at rows 1..H).

        dy taps: aligned leading-dim slabs (free views; the (H, Wp, C) ->
        (H*Wp, C) reshape is layout-free because Wp % 16 == 0).  dx taps are
        fused along the matmul N dimension (wf_ref[dy] is (Cin, 3*64)), so
        only 3 MXU matmuls are issued per conv; the per-dx column shift is
        applied to the 64-lane result slices via two Horner-style rolls on
        the XLU.  For data stored at column origin c0, output pixel (y, x)
        lands at flat row y*Wp + x + c0 + 1 of the returned accumulator.
        """
        cin = pad_ref.shape[-1]
        m = None
        for dy in range(3):
            slab = pad_ref[dy:dy + H, :, :].reshape(HWp, cin)
            t = jnp.dot(slab, wf_ref[dy], preferred_element_type=f32)
            m = t if m is None else m + t
        t0, t1, t2 = m[:, 0:64], m[:, 64:128], m[:, 128:192]
        # acc[j] = t0[j-2] + t1[j-1] + t2[j]
        acc = _shift_rows_down(t0, 1, roll_like_jnp)
        acc = _shift_rows_down(acc + t1, 1, roll_like_jnp)
        return acc + t2

    # --- decoder conv #1 (K=128, N=192 fused) + BN + ReLU --------------------
    acc1 = conv3x3(pad_a, w1_ref)                       # valid cols: [1, W+1)
    h1 = jnp.maximum(acc1 * s1_ref[...] + b1_ref[...], 0.0).reshape(H, Wp, 64)
    col = lax.broadcasted_iota(jnp.int32, (1, Wp, 1), 1)
    keep = jnp.logical_and(col >= 1, col < W + 1)
    # zero the out-of-image columns so they act as conv-2 "same" padding, then
    # store full rows (aligned, lane-dense) into pad_b (data at col origin 1).
    pad_b[1:H + 1, :, :] = jnp.where(keep, h1, 0.0).astype(pad_b.dtype)

    # --- decoder conv #2 (K=64, N=192 fused) + BN + ReLU ---------------------
    acc2 = conv3x3(pad_b, w2_ref)                       # valid cols: [2, W+2)
    h2 = jnp.maximum(acc2 * s2_ref[...] + b2_ref[...], 0.0)

    # --- final 1x1 conv (bias); 128 output lanes, stored bf16 ----------------
    out = jnp.dot(h2.astype(w3_ref.dtype), w3_ref[...],
                  preferred_element_type=f32) + b3_ref[...]
    out_ref[0] = out.reshape(H, Wp, out_ref.shape[-1]).astype(out_ref.dtype)


# ----------------------------------------------------------------------------
# Wrapper
# ----------------------------------------------------------------------------
def _full_spec(shape):
    return pl.BlockSpec(shape, lambda n, _r=len(shape): (0,) * _r)


def _vmem_limit_bytes(H, W, Wp, c_low):
    bf, f32 = 2, 4
    hp = H + 2
    io = 2 * (H * W * 64 * bf + H * W * c_low * bf + H * Wp * 128 * bf)
    scratch = hp * Wp * (128 + 64) * bf
    temps = H * Wp * (192 + 3 * 64 + 2 * 128) * f32 + H * Wp * 128 * bf
    weights = 2 * ((c_low * 64 + 3 * 128 * 192 + 3 * 64 * 192 + 64 * 128) * bf
                   + 8 * 1024)
    want = 2 * (io + scratch + temps + weights)
    try:
        cap = int(pltpu.get_tpu_info().vmem_capacity_bytes) - (8 << 20)
    except Exception:  # conservative fallback: fits v7x's 64 MiB per-TC VMEM
        cap = 56 << 20
    return int(min(cap, max(32 << 20, want)))


def _cost_estimate(N, H, W, Wp, c_low, num_classes):
    flops = 2 * N * (H * W * c_low * 64
                     + H * Wp * (9 * 128 * 64 + 9 * 64 * 64 + 64 * 128))
    bytes_accessed = (N * (H * W * (64 + c_low) * 2 + H * Wp * 128 * 2)
                      + (c_low * 64 + 3 * 128 * 192 + 3 * 64 * 192
                         + 64 * 128) * 2 + num_classes * 4)
    return pl.CostEstimate(flops=int(flops), transcendentals=0,
                           bytes_accessed=int(bytes_accessed))


@functools.partial(jax.jit, static_argnames=("num_classes", "roll_like_jnp"))
def _deeplab_decoder_impl(x_nchw, low_nchw, params, *, num_classes,
                          roll_like_jnp):
    bf16 = jnp.bfloat16
    # NCHW -> NHWC (channels on the 128-wide lane dimension)
    x = jnp.transpose(x_nchw, (0, 2, 3, 1)).astype(jnp.float32)
    low = jnp.transpose(low_nchw, (0, 2, 3, 1)).astype(jnp.float32)

    N, H, W, c_low = low.shape
    x_up = bilinear_upsample_nhwc(x, H, W).astype(bf16)        # (N, H, W, 64)
    low = low.astype(bf16)

    # Padded scratch width.  Invariants relied on by the in-kernel roll
    # wrap-around trick (see _decoder_kernel):
    #   * Wp >= W + 3  -> >= 2 always-zero columns at the right edge
    #   * Wp % 16 == 0 -> (H, Wp, C) <-> (H*Wp, C) reshapes are layout-free
    Wp = _round_up(W + 3, 16)
    assert Wp >= W + 3 and Wp % 16 == 0, (W, Wp)

    # --- weight packing ------------------------------------------------------
    # low-level 1x1: pad 48 -> 64 output channels (zero weight/scale/bias) so
    # the lane-concat with x_up is one dense 128-lane value.
    wll = jnp.pad(params["wll"], ((0, 0), (0, 16)))
    sll = jnp.pad(params["sll"], ((0, 0), (0, 16)))
    bll = jnp.pad(params["bll"], ((0, 0), (0, 16)))
    # conv #1: fold the channel concat into K=128 and fuse the three dx taps
    # along N: (3, 3, 128, 64) -> (3, 128, 192).
    w1 = jnp.concatenate([params["w1x"], params["w1l"]], axis=2)  # (3,3,112,64)
    w1 = jnp.pad(w1, ((0, 0), (0, 0), (0, 128 - w1.shape[2]), (0, 0)))
    w1f = jnp.transpose(w1, (0, 2, 1, 3)).reshape(3, 128, 192)
    # conv #2: fuse dx along N: (3, 3, 64, 64) -> (3, 64, 192).
    w2f = jnp.transpose(params["w2"], (0, 2, 1, 3)).reshape(3, 64, 192)
    # final 1x1: pad classes to 128 lanes (lane-dense output store).
    w3 = jnp.pad(params["w3"], ((0, 0), (0, 128 - num_classes)))
    b3 = jnp.pad(params["b3"], ((0, 0), (0, 128 - num_classes)))

    weights = (wll.astype(bf16), sll, bll,
               w1f.astype(bf16), params["s1"], params["b1"],
               w2f.astype(bf16), params["s2"], params["b2"],
               w3.astype(bf16), b3)

    kernel = functools.partial(_decoder_kernel, H=H, W=W, Wp=Wp,
                               roll_like_jnp=roll_like_jnp)

    in_specs = [
        pl.BlockSpec((1, H, W, 64), lambda n: (n, 0, 0, 0)),
        pl.BlockSpec((1, H, W, c_low), lambda n: (n, 0, 0, 0)),
    ] + [_full_spec(w.shape) for w in weights]

    out_full = pl.pallas_call(
        kernel,
        out_shape=jax.ShapeDtypeStruct((N, H, Wp, 128), jnp.bfloat16),
        grid_spec=pltpu.PrefetchScalarGridSpec(
            num_scalar_prefetch=0,
            grid=(N,),
            in_specs=in_specs,
            out_specs=pl.BlockSpec((1, H, Wp, 128), lambda n: (n, 0, 0, 0)),
            scratch_shapes=[
                pltpu.VMEM((H + 2, Wp, 128), bf16),   # conv-1 padded input
                pltpu.VMEM((H + 2, Wp, 64), bf16),    # conv-2 padded input
            ],
        ),
        compiler_params=pltpu.CompilerParams(
            # batch axis is independent per step (per-step border init), so it
            # can shard across v7x's two TensorCores.
            dimension_semantics=("parallel",),
            vmem_limit_bytes=_vmem_limit_bytes(H, W, Wp, c_low),
        ),
        cost_estimate=_cost_estimate(N, H, W, Wp, c_low, num_classes),
    )(x_up, low, *weights)

    # valid pixels at columns [2, 2+W); real classes at lanes [0, num_classes)
    out_nhwc = out_full[:, :, 2:2 + W, :num_classes].astype(jnp.float32)
    return jnp.transpose(out_nhwc, (0, 3, 1, 2))        # NHWC -> NCHW


def deeplab_decoder(x_nchw, low_nchw, params, *, num_classes):
    return _deeplab_decoder_impl(
        x_nchw, low_nchw, params, num_classes=num_classes,
        roll_like_jnp=_pltpu_roll_is_jnp_like())


# ----------------------------------------------------------------------------
# Deterministic parameter construction (eval-mode BN folded into scale/bias)
# ----------------------------------------------------------------------------
def fold_bn(key, channels, eps=1e-5):
    k1, k2, k3, k4 = jax.random.split(key, 4)
    gamma = jax.random.uniform(k1, (channels,), minval=0.5, maxval=1.5)
    beta = jax.random.normal(k2, (channels,)) * 0.1
    mean = jax.random.normal(k3, (channels,)) * 0.1
    var = jax.random.uniform(k4, (channels,), minval=0.5, maxval=1.5)
    scale = gamma / jnp.sqrt(var + eps)
    bias = beta - mean * scale
    return scale.reshape(1, channels), bias.reshape(1, channels)


def make_params(key, low_level_channels, num_classes):
    ks = jax.random.split(key, 8)
    p = {}
    p["wll"] = jax.random.normal(ks[0], (low_level_channels, 48)) * 0.1
    p["sll"], p["bll"] = fold_bn(ks[1], 48)
    p["w1x"] = jax.random.normal(ks[2], (3, 3, 64, 64)) * 0.05
    p["w1l"] = jax.random.normal(ks[3], (3, 3, 48, 64)) * 0.05
    p["s1"], p["b1"] = fold_bn(ks[4], 64)
    p["w2"] = jax.random.normal(ks[5], (3, 3, 64, 64)) * 0.05
    p["s2"], p["b2"] = fold_bn(ks[6], 64)
    k7a, k7b = jax.random.split(ks[7])
    p["w3"] = jax.random.normal(k7a, (64, num_classes)) * 0.1
    p["b3"] = (jax.random.normal(k7b, (num_classes,)) * 0.1).reshape(1, num_classes)
    return jax.tree_util.tree_map(lambda a: a.astype(jnp.float32), p)


# ----------------------------------------------------------------------------
# Plain-JAX reference (mirrors the kernel's bf16 rounding points)
# ----------------------------------------------------------------------------
def reference(x_nchw, low_nchw, params, num_classes):
    bf16 = jnp.bfloat16
    dn = ("NHWC", "HWIO", "NHWC")
    conv = functools.partial(jax.lax.conv_general_dilated,
                             window_strides=(1, 1),
                             dimension_numbers=dn,
                             preferred_element_type=jnp.float32)
    x = jnp.transpose(x_nchw, (0, 2, 3, 1)).astype(jnp.float32)
    low = jnp.transpose(low_nchw, (0, 2, 3, 1)).astype(jnp.float32)
    H, W = low.shape[1:3]
    x_up = bilinear_upsample_nhwc(x, H, W).astype(bf16)
    low = low.astype(bf16)

    wll = params["wll"].astype(bf16).reshape(1, 1, -1, 48)
    low1 = jnp.maximum(conv(low, wll, padding="VALID") * params["sll"]
                       + params["bll"], 0.0).astype(bf16)
    cat = jnp.concatenate([x_up, low1], axis=-1)
    w1 = jnp.concatenate([params["w1x"], params["w1l"]], axis=2).astype(bf16)
    h1 = jnp.maximum(conv(cat, w1, padding="SAME") * params["s1"]
                     + params["b1"], 0.0).astype(bf16)
    h2 = jnp.maximum(conv(h1, params["w2"].astype(bf16), padding="SAME")
                     * params["s2"] + params["b2"], 0.0)
    w3 = params["w3"].astype(bf16).reshape(1, 1, 64, num_classes)
    out = conv(h2.astype(bf16), w3, padding="VALID") + params["b3"]
    return jnp.transpose(out, (0, 3, 1, 2))


if __name__ == "__main__":
    N = 2
    LOW_LEVEL_CHANNELS = 8
    NUM_CLASSES = 6
    ASPP_OUT = 64            # fixed by the module default
    H_LOW, W_LOW = 16, 16    # low-level feature spatial size
    H_X, W_X = 8, 8          # ASPP output spatial size (upsampled 2x)

    key = jax.random.PRNGKey(0)
    kx, klow, kp = jax.random.split(key, 3)
    x = jax.random.normal(kx, (N, ASPP_OUT, H_X, W_X), dtype=jnp.float32)
    low_level_feat = jax.random.normal(
        klow, (N, LOW_LEVEL_CHANNELS, H_LOW, W_LOW), dtype=jnp.float32)
    params = make_params(kp, LOW_LEVEL_CHANNELS, NUM_CLASSES)

    out = deeplab_decoder(x, low_level_feat, params, num_classes=NUM_CLASSES)
    out = jax.block_until_ready(out)
    assert out.shape == (N, NUM_CLASSES, H_LOW, W_LOW), out.shape

    ref = jax.block_until_ready(
        reference(x, low_level_feat, params, NUM_CLASSES))
    max_err = float(jnp.max(jnp.abs(out - ref)))
    assert jnp.allclose(out, ref, atol=2.5e-2, rtol=2.5e-2), max_err

    print("KERNEL_OK")
</pallas_src>

<mosaic_0001>
module attributes {stable_mosaic.version = 11 : i64} {
  func.func @probe(%arg0: memref<8x128xf32, #tpu.memory_space<vmem>>, %arg1: memref<8x128xf32, #tpu.memory_space<vmem>>) attributes {dimension_semantics = [], scalar_prefetch = 0 : i64, scratch_operands = 0 : i64, tpu.core_type = #tpu.core_type<tc>} {
    %c0 = arith.constant 0 : index
    %c0_0 = arith.constant 0 : index
    %0 = vector.load %arg0[%c0, %c0_0] : memref<8x128xf32, #tpu.memory_space<vmem>>, vector<8x128xf32>
    %c1_i32 = arith.constant 1 : i32
    %1 = tpu.dynamic_rotate %0 by %c1_i32 dim 0 : vector<8x128xf32>, i32 -> vector<8x128xf32>
    %c0_1 = arith.constant 0 : index
    %c0_2 = arith.constant 0 : index
    %2 = vector.load %arg1[%c0_1, %c0_2] : memref<8x128xf32, #tpu.memory_space<vmem>>, vector<8x128xf32>
    tpu.vector_store %arg1[%c0_1, %c0_2], %1 {strides = array<i32>} : memref<8x128xf32, #tpu.memory_space<vmem>>, vector<8x128xf32>,
    return
  }
}

</mosaic_0001>

<llo_original>
// kernel: tpu_custom_call.1
$region0: #{tpu_custom_call.1}
  #allocation0 [shape = 'u32[]', space=smem, size = 0x4, offset = 0x4, fixed_abs, tag = 'smem constant byte address 0x4 - core index']
  #allocation1 [shape = 'u32[144,128]{1,0:T(1,128)}', space=vmem, size = 0x12000, scoped, tag = 'internal scratch']
  %s0 = inlined_call_operand.hbm [shape: f32[8,128], index: 0, kind: input, shape index: {}]
  %s1 = inlined_call_operand.hbm [shape: f32[8,128], index: 1, kind: output, shape index: {}]
  %s2 = sld [smem:[#allocation0]]
  $region18: #{tpu_custom_call.1} parent=0
    _
  %s4 = ssub.s32 1, %s2
  %s5 = scalar_select 0, %s4, %s2
  $region1: #{tpu_custom_call.1} parent=0
    #allocation2 [shape = 'u8[4096]{0}', space=vmem, size = 0x1000, scoped, tag = 'input window, operand 0, single buffered']
    #allocation3 [shape = 's32[1]{0}', space=sflag, size = 0x4, scoped, tag = 'scoped memory for tpu_custom_call.1']
    #allocation4 [shape = 's32[1]{0}', space=sflag, size = 0x4, scoped, tag = 'scoped memory for tpu_custom_call.1']
    #allocation5 [shape = 'u8[4096]{0}', space=vmem, size = 0x1000, scoped, tag = 'output window, operand 0, single buffered']
    %6 = vsyncpa [#allocation3], 0
    %7 = vsyncpa [#allocation4], 0
    // Predicated region
    $region2: #{tpu_custom_call.1} parent=1 // pred_check
      _
    $region3: #{tpu_custom_call.1} parent=1 // pred_check_branch
      %9 = sbr.rel (0) target = $region5
    $region4: #{tpu_custom_call.1} parent=1 // pred_region
      %s11 = ssub.s32 128, 128
      %12 = vsyncadd [#allocation3], %s11
      %s14 = sshll.u32 [#allocation2], 4
      %s15 = int_to_ptr.vmem [resolvable:$true] %s14
      %17 = dma.hbm_to_vmem [thread:$0]  %s0, 128, %s15, [#allocation3]
    $region5: #{tpu_custom_call.1} parent=1 // pred_fallthru
      _
    // Predicated region
    $region6: #{tpu_custom_call.1} parent=1 // pred_check
      _
    $region7: #{tpu_custom_call.1} parent=1 // pred_check_branch
      %19 = sbr.rel (0) target = $region9
    $region8: #{tpu_custom_call.1} parent=1 // pred_region
      %20 = dma.done [#allocation3], 128
    $region9: #{tpu_custom_call.1} parent=1 // pred_fallthru
      _
    %v21 = vld [vmem:[#allocation2] sm:$0xff]
    %v22 = vrot.slane %v21, 7
    %23 = vst [vmem:[#allocation5] sm:$0xff] %v22
    // Predicated region
    $region10: #{tpu_custom_call.1} parent=1 // pred_check
      _
    $region11: #{tpu_custom_call.1} parent=1 // pred_check_branch
      %25 = sbr.rel (0) target = $region13
    $region12: #{tpu_custom_call.1} parent=1 // pred_region
      %s27 = ssub.s32 128, 128
      %28 = vsyncadd [#allocation4], %s27
      %s30 = sshll.u32 [#allocation5], 4
      %s31 = int_to_ptr.vmem [resolvable:$true] %s30
      %33 = dma.vmem_to_hbm [thread:$0]  %s31, 128, %s1, [#allocation4]
    $region13: #{tpu_custom_call.1} parent=1 // pred_fallthru
      _
    // Predicated region
    $region14: #{tpu_custom_call.1} parent=1 // pred_check
      _
    $region15: #{tpu_custom_call.1} parent=1 // pred_check_branch
      %35 = sbr.rel (0) target = $region17
    $region16: #{tpu_custom_call.1} parent=1 // pred_region
      %36 = dma.done [#allocation4], 128
    $region17: #{tpu_custom_call.1} parent=1 // pred_fallthru
      _
    %37 = vsyncpa [#allocation3], 1
    %38 = vsyncpa [#allocation4], 1

</llo_original>
